<compile_context>
chip_gen: v6e
topology: v6e:2x2x1
jax: 0.10.0
libtpu: 0.0.40
codegen_flags: <defaults>
</compile_context>

<pallas_src>
import functools

import jax
import jax.numpy as jnp
from jax.experimental import pallas as pl
from jax.experimental.pallas import tpu as pltpu

LANE = 128
MAX_LANES = 1024                 # lane-dense width cap (keeps (8,w) partials register-friendly)
VMEM_LIMIT_BYTES = 48 << 20      # fits v7x's 64 MiB/TC with headroom; fine on 128 MiB parts


def _default_tile_bytes():
    """~8 MiB tiles on 128 MiB-VMEM chips (v5e/v6e), ~4 MiB on v7x (64 MiB/TC)."""
    try:
        vmem = pltpu.get_tpu_info().vmem_capacity_bytes
    except Exception:
        return 4 << 20
    return (8 << 20) if vmem >= (96 << 20) else (4 << 20)


# ---------------------------------------------------------------------------
# Layout helpers
# ---------------------------------------------------------------------------
def _layout(n, itemsize, target_tile_bytes):
    """Pick (lane_width, rows, tile_r, aligned) for a lane-dense 2D view.

    Prefers the largest power-of-two width w <= MAX_LANES such that n is a
    multiple of 8*w (then no padding at all); otherwise falls back to the
    largest w that still yields at least one (8, w) slab and pads < 8*w
    elements.  tile_r is a multiple-of-8 divisor of rows (grid divides evenly,
    no tile_r-multiple padding).
    """
    w_fit = LANE
    w_aligned = None
    cand = LANE
    while cand <= MAX_LANES and 8 * cand <= n:
        w_fit = cand
        if n % (8 * cand) == 0:
            w_aligned = cand
        cand *= 2
    aligned = w_aligned is not None
    w = w_aligned if aligned else w_fit

    rows = -(-n // w)                       # cdiv
    rows = ((rows + 7) // 8) * 8            # sublane-align (no-op when aligned)

    max_tr = max(8, (target_tile_bytes // (w * itemsize)) // 8 * 8)
    tile_r = 8
    for d in range(8, min(rows, max_tr) + 1, 8):
        if rows % d == 0:
            tile_r = d
    return w, rows, tile_r, aligned


def _to_2d(x, target_tile_bytes):
    """Flatten to a (rows, w) lane-dense view.

    Aligned sizes: pure reshape (no pad, no output slice).  Ragged sizes: pad
    with < 8*w zeros (neutral for sum / sum-of-squares), slice off afterwards.
    """
    n = x.size
    w, rows, tile_r, aligned = _layout(n, x.dtype.itemsize, target_tile_bytes)
    flat = x.reshape(-1)
    if not aligned:
        # TODO(synk): handle the ragged tail with in-kernel masking on raw HBM
        # refs to remove this pad/slice copy pair entirely.
        flat = jnp.pad(flat, (0, rows * w - n))
    x2d = flat.reshape(rows, w)

    if aligned:
        def unflatten(y2d):
            return y2d.reshape(x.shape)
    else:
        def unflatten(y2d):
            return y2d.reshape(-1)[:n].reshape(x.shape)

    return x2d, tile_r, unflatten


# ---------------------------------------------------------------------------
# Kernels
# ---------------------------------------------------------------------------
def _moments_kernel(x_ref, out_ref, acc_s, acc_q, *, spc, steps, guard):
    """Accumulate sum / sum-of-squares into small (8, w) VMEM accumulators.

    The input tile is reduced over sublane groups in registers first; the
    single cross-lane reduction to scalars happens once, on the last step of
    this core's slice of the grid.
    """
    i = pl.program_id(1)

    @pl.when(i == 0)
    def _():
        acc_s[...] = jnp.zeros_like(acc_s)
        acc_q[...] = jnp.zeros_like(acc_q)

    def accumulate():
        x = x_ref[...].astype(jnp.float32)
        tr, w = x.shape
        xr = x.reshape(tr // 8, 8, w)            # sublane-group split (layout-aligned)
        acc_s[...] += jnp.sum(xr, axis=0)
        acc_q[...] += jnp.sum(xr * xr, axis=0)

    if guard:
        c = pl.program_id(0)
        pl.when(c * spc + i < steps)(accumulate)  # skip the duplicated clamp block
    else:
        accumulate()

    @pl.when(i == pl.num_programs(1) - 1)
    def _():
        out_ref[0, 0] = jnp.sum(acc_s[...])
        out_ref[0, 1] = jnp.sum(acc_q[...])


def _affine_kernel(scale_ref, shift_ref, x_ref, o_ref):
    """y = x * scale + shift; scale/shift are SMEM-prefetched scalars."""
    s = scale_ref[0]
    b = shift_ref[0]
    o_ref[...] = (x_ref[...].astype(jnp.float32) * s + b).astype(o_ref.dtype)


# ---------------------------------------------------------------------------
# pallas_call wrappers
# ---------------------------------------------------------------------------
def _global_moments(x2d, tile_r):
    """Return (sum(x), sum(x*x)) over the whole 2D view."""
    rows, w = x2d.shape
    steps = rows // tile_r
    ncores = 2 if steps >= 2 else 1           # explicit 2-TC split on v7x
    spc = -(-steps // ncores)                 # cdiv: works for odd step counts
    guard = (ncores * spc != steps)

    if guard:
        def x_map(c, i):
            return (jnp.minimum(c * spc + i, steps - 1), 0)
    else:
        def x_map(c, i):
            return (c * spc + i, 0)

    kernel = functools.partial(_moments_kernel, spc=spc, steps=steps, guard=guard)

    out = pl.pallas_call(
        kernel,
        out_shape=jax.ShapeDtypeStruct((ncores, 2), jnp.float32),
        grid_spec=pltpu.PrefetchScalarGridSpec(
            num_scalar_prefetch=0,
            grid=(ncores, spc),
            in_specs=[pl.BlockSpec((tile_r, w), x_map)],
            out_specs=pl.BlockSpec((1, 2), lambda c, i: (c, 0),
                                   memory_space=pltpu.MemorySpace.SMEM),
            scratch_shapes=[pltpu.VMEM((8, w), jnp.float32),
                            pltpu.VMEM((8, w), jnp.float32)]),
        compiler_params=pltpu.CompilerParams(
            dimension_semantics=("parallel", "arbitrary"),
            vmem_limit_bytes=VMEM_LIMIT_BYTES),
        cost_estimate=pl.CostEstimate(
            flops=3 * rows * w, transcendentals=0,
            bytes_accessed=rows * w * x2d.dtype.itemsize),
    )(x2d)
    return out[:, 0].sum(), out[:, 1].sum()


def _apply_affine(x2d, tile_r, scale, shift):
    rows, w = x2d.shape
    steps = rows // tile_r
    scale = jnp.asarray(scale, jnp.float32).reshape(1)
    shift = jnp.asarray(shift, jnp.float32).reshape(1)
    # TODO(synk): expose input_output_aliases={2: 0} when the caller can donate x.
    return pl.pallas_call(
        _affine_kernel,
        out_shape=jax.ShapeDtypeStruct((rows, w), x2d.dtype),
        grid_spec=pltpu.PrefetchScalarGridSpec(
            num_scalar_prefetch=2,            # scale, shift -> SMEM, fetched once
            grid=(steps,),
            in_specs=[pl.BlockSpec((tile_r, w), lambda i, s, b: (i, 0))],
            out_specs=pl.BlockSpec((tile_r, w), lambda i, s, b: (i, 0))),
        compiler_params=pltpu.CompilerParams(
            dimension_semantics=("parallel",),
            vmem_limit_bytes=VMEM_LIMIT_BYTES),
        cost_estimate=pl.CostEstimate(
            flops=2 * rows * w, transcendentals=0,
            bytes_accessed=2 * rows * w * x2d.dtype.itemsize),
    )(scale, shift, x2d)


# ---------------------------------------------------------------------------
# Module equivalent
# ---------------------------------------------------------------------------
class StandardScaler:
    """JAX/Pallas port of msanii.transforms.feature_scaling.StandardScaler.

    Buffers mirror the PyTorch __init__: momentum=0.001, running_mean=0.0,
    running_var=1.0, fitted=False.
    """

    def __init__(self, momentum=0.001, momentum_decay=0.99, eps=1e-5,
                 training=True, target_tile_bytes=None):
        self.eps = float(eps)
        self.momentum_decay = float(momentum_decay)
        self.momentum = jnp.float32(momentum)
        self.running_mean = jnp.float32(0.0)
        self.running_var = jnp.float32(1.0)
        self.fitted = False
        self.training = training
        self.target_tile_bytes = (int(target_tile_bytes) if target_tile_bytes
                                  else _default_tile_bytes())

    def __call__(self, x, inverse=False):
        if inverse:
            return self.inverse_transform(x)
        return self.transform(x)

    def transform(self, x):
        x2d, tile_r, unflatten = _to_2d(x, self.target_tile_bytes)
        if self.training:
            total, total_sq = _global_moments(x2d, tile_r)
            n = jnp.float32(x.size)
            batch_mean = total / n
            # unbiased variance (torch.Tensor.var() default, ddof=1), clamped
            # against f32 cancellation going slightly negative.
            batch_var = jnp.maximum((total_sq - total * total / n) / (n - 1.0), 0.0)
            self._update_stats(batch_mean, batch_var)
        else:
            batch_mean, batch_var = self.running_mean, self.running_var
        inv_std = jax.lax.rsqrt(batch_var + self.eps)
        y2d = _apply_affine(x2d, tile_r, inv_std, -batch_mean * inv_std)
        return unflatten(y2d)

    def inverse_transform(self, x):
        x2d, tile_r, unflatten = _to_2d(x, self.target_tile_bytes)
        std = jnp.sqrt(self.running_var + self.eps)
        y2d = _apply_affine(x2d, tile_r, std, self.running_mean)
        return unflatten(y2d)

    def step(self):
        self.momentum = self.momentum_decay * self.momentum

    # TODO(synk): Python-attribute mutation with traced values is not
    # jit-functional; move running stats into an explicit state pytree for
    # jitted training loops.
    def _update_stats(self, batch_mean, batch_var):
        if not self.fitted:
            self.running_mean = batch_mean
            self.running_var = batch_var
            self.fitted = True
        else:
            m = self.momentum
            self.running_mean = (1.0 - m) * self.running_mean + m * batch_mean
            self.running_var = (1.0 - m) * self.running_var + m * batch_var


# ---------------------------------------------------------------------------
# Self-test
# ---------------------------------------------------------------------------
if __name__ == "__main__":
    key1, key2, key3 = jax.random.split(jax.random.PRNGKey(0), 3)
    eps = 1e-5

    # --- test 1: small NCHW input (aligned fast path, single-tile grid) -----
    x = jax.random.normal(key1, (2, 4, 16, 16), dtype=jnp.float32) * 3.0 + 1.0
    scaler = StandardScaler(eps=eps, training=True)

    y = jax.block_until_ready(scaler(x))
    mean_ref = jnp.mean(x)
    var_ref = jnp.var(x, ddof=1)
    y_ref = (x - mean_ref) / jnp.sqrt(var_ref + eps)
    assert jnp.allclose(y, y_ref, atol=1e-5, rtol=1e-5)
    assert jnp.allclose(scaler.running_mean, mean_ref, atol=1e-5, rtol=1e-5)
    assert jnp.allclose(scaler.running_var, var_ref, atol=1e-5, rtol=1e-5)

    # inverse path (uses running stats)
    x_rec = jax.block_until_ready(scaler(y, inverse=True))
    x_rec_ref = y_ref * jnp.sqrt(scaler.running_var + eps) + scaler.running_mean
    assert jnp.allclose(x_rec, x_rec_ref, atol=1e-5, rtol=1e-5)

    # eval-mode forward uses running stats (== batch stats here)
    scaler.training = False
    y_eval = jax.block_until_ready(scaler(x))
    assert jnp.allclose(y_eval, y_ref, atol=1e-5, rtol=1e-5)

    # --- test 2: ragged element count + multi-step even split ---------------
    x2 = jax.random.normal(key2, (2, 4, 63, 65), dtype=jnp.float32) * 0.5 - 2.0
    scaler2 = StandardScaler(eps=eps, training=True, target_tile_bytes=32 << 10)
    y2 = jax.block_until_ready(scaler2(x2))
    m2 = jnp.mean(x2)
    v2 = jnp.var(x2, ddof=1)
    y2_ref = (x2 - m2) / jnp.sqrt(v2 + eps)
    assert jnp.allclose(y2, y2_ref, atol=1e-4, rtol=1e-4)
    assert jnp.allclose(scaler2.running_mean, m2, atol=1e-4, rtol=1e-4)
    assert jnp.allclose(scaler2.running_var, v2, atol=1e-4, rtol=1e-4)

    # --- test 3: odd grid-step count (exercises clamped 2-core split guard) -
    x3 = jax.random.normal(key3, (2, 3, 16, 32), dtype=jnp.float32) * 2.0 + 0.5
    scaler3 = StandardScaler(eps=eps, training=True, target_tile_bytes=8 << 10)
    y3 = jax.block_until_ready(scaler3(x3))
    m3 = jnp.mean(x3)
    v3 = jnp.var(x3, ddof=1)
    y3_ref = (x3 - m3) / jnp.sqrt(v3 + eps)
    assert jnp.allclose(y3, y3_ref, atol=1e-4, rtol=1e-4)
    assert jnp.allclose(scaler3.running_mean, m3, atol=1e-4, rtol=1e-4)
    assert jnp.allclose(scaler3.running_var, v3, atol=1e-4, rtol=1e-4)

    print("KERNEL_OK")
</pallas_src>

<mosaic_0001>
module attributes {stable_mosaic.version = 11 : i64} {
  func.func @_moments_kernel(%arg0: i32, %arg1: i32, %arg2: memref<8x256xf32, #tpu.memory_space<vmem>>, %arg3: memref<1x2xf32, #tpu.memory_space<smem>>, %arg4: memref<8x256xf32, #tpu.memory_space<vmem>>, %arg5: memref<8x256xf32, #tpu.memory_space<vmem>>) attributes {dimension_semantics = [#tpu.dimension_semantics<parallel>, #tpu.dimension_semantics<arbitrary>], iteration_bounds = array<i64: 1, 1>, scalar_prefetch = 0 : i64, scratch_operands = 2 : i64, tpu.core_type = #tpu.core_type<tc>, window_params = [{transform_indices = @transform_0, window_bounds = array<i64: 8, 256>}, {transform_indices = @transform_1, window_bounds = array<i64: 1, 2>}]} {
    %c0_i32 = arith.constant 0 : i32
    %0 = arith.cmpi eq, %arg1, %c0_i32 : i32
    %1 = arith.extui %0 : i1 to i32
    %c0_i32_0 = arith.constant 0 : i32
    %2 = arith.cmpi ne, %1, %c0_i32_0 : i32
    scf.if %2 {
      %cst_13 = arith.constant 0.000000e+00 : f32
      %17 = vector.broadcast %cst_13 : f32 to vector<8x256xf32>
      %c0_14 = arith.constant 0 : index
      %c0_15 = arith.constant 0 : index
      %18 = vector.load %arg4[%c0_14, %c0_15] : memref<8x256xf32, #tpu.memory_space<vmem>>, vector<8x256xf32>
      tpu.vector_store %arg4[%c0_14, %c0_15], %17 {strides = array<i32>} : memref<8x256xf32, #tpu.memory_space<vmem>>, vector<8x256xf32>,
      %cst_16 = arith.constant 0.000000e+00 : f32
      %19 = vector.broadcast %cst_16 : f32 to vector<8x256xf32>
      %c0_17 = arith.constant 0 : index
      %c0_18 = arith.constant 0 : index
      %20 = vector.load %arg5[%c0_17, %c0_18] : memref<8x256xf32, #tpu.memory_space<vmem>>, vector<8x256xf32>
      tpu.vector_store %arg5[%c0_17, %c0_18], %19 {strides = array<i32>} : memref<8x256xf32, #tpu.memory_space<vmem>>, vector<8x256xf32>,
    } else {
    }
    %c0 = arith.constant 0 : index
    %c0_1 = arith.constant 0 : index
    %3 = vector.load %arg2[%c0, %c0_1] : memref<8x256xf32, #tpu.memory_space<vmem>>, vector<8x256xf32>
    %4 = vector.shape_cast %3 : vector<8x256xf32> to vector<1x8x256xf32>
    %c0_2 = arith.constant 0 : index
    %c0_3 = arith.constant 0 : index
    %5 = vector.load %arg4[%c0_2, %c0_3] : memref<8x256xf32, #tpu.memory_space<vmem>>, vector<8x256xf32>
    %cst = arith.constant dense<0.000000e+00> : vector<8x256xf32>
    %6 = vector.multi_reduction <add>, %4, %cst [0] : vector<1x8x256xf32> to vector<8x256xf32>
    %7 = arith.addf %5, %6 : vector<8x256xf32>
    %c0_4 = arith.constant 0 : index
    %c0_5 = arith.constant 0 : index
    %8 = vector.load %arg4[%c0_4, %c0_5] : memref<8x256xf32, #tpu.memory_space<vmem>>, vector<8x256xf32>
    tpu.vector_store %arg4[%c0_4, %c0_5], %7 {strides = array<i32>} : memref<8x256xf32, #tpu.memory_space<vmem>>, vector<8x256xf32>,
    %c0_6 = arith.constant 0 : index
    %c0_7 = arith.constant 0 : index
    %9 = vector.load %arg5[%c0_6, %c0_7] : memref<8x256xf32, #tpu.memory_space<vmem>>, vector<8x256xf32>
    %10 = arith.mulf %4, %4 : vector<1x8x256xf32>
    %cst_8 = arith.constant dense<0.000000e+00> : vector<8x256xf32>
    %11 = vector.multi_reduction <add>, %10, %cst_8 [0] : vector<1x8x256xf32> to vector<8x256xf32>
    %12 = arith.addf %9, %11 : vector<8x256xf32>
    %c0_9 = arith.constant 0 : index
    %c0_10 = arith.constant 0 : index
    %13 = vector.load %arg5[%c0_9, %c0_10] : memref<8x256xf32, #tpu.memory_space<vmem>>, vector<8x256xf32>
    tpu.vector_store %arg5[%c0_9, %c0_10], %12 {strides = array<i32>} : memref<8x256xf32, #tpu.memory_space<vmem>>, vector<8x256xf32>,
    %c0_i32_11 = arith.constant 0 : i32
    %14 = arith.cmpi eq, %arg1, %c0_i32_11 : i32
    %15 = arith.extui %14 : i1 to i32
    %c0_i32_12 = arith.constant 0 : i32
    %16 = arith.cmpi ne, %15, %c0_i32_12 : i32
    scf.if %16 {
      %c0_13 = arith.constant 0 : index
      %c0_14 = arith.constant 0 : index
      %17 = vector.load %arg4[%c0_13, %c0_14] : memref<8x256xf32, #tpu.memory_space<vmem>>, vector<8x256xf32>
      %18 = vector.shape_cast %17 : vector<8x256xf32> to vector<1x8x256xf32>
      %cst_15 = arith.constant dense<0.000000e+00> : vector<1xf32>
      %19 = vector.multi_reduction <add>, %18, %cst_15 [1, 2] : vector<1x8x256xf32> to vector<1xf32>
      %20 = vector.shape_cast %19 : vector<1xf32> to vector<1x1x1xf32>
      %21 = vector.extract %20[0, 0, 0] : f32 from vector<1x1x1xf32>
      %c0_16 = arith.constant 0 : index
      %c0_17 = arith.constant 0 : index
      %22 = memref.load %arg3[%c0_16, %c0_17] : memref<1x2xf32, #tpu.memory_space<smem>>
      memref.store %21, %arg3[%c0_16, %c0_17] : memref<1x2xf32, #tpu.memory_space<smem>>
      %c0_18 = arith.constant 0 : index
      %c0_19 = arith.constant 0 : index
      %23 = vector.load %arg5[%c0_18, %c0_19] : memref<8x256xf32, #tpu.memory_space<vmem>>, vector<8x256xf32>
      %24 = vector.shape_cast %23 : vector<8x256xf32> to vector<1x8x256xf32>
      %cst_20 = arith.constant dense<0.000000e+00> : vector<1xf32>
      %25 = vector.multi_reduction <add>, %24, %cst_20 [1, 2] : vector<1x8x256xf32> to vector<1xf32>
      %26 = vector.shape_cast %25 : vector<1xf32> to vector<1x1x1xf32>
      %27 = vector.extract %26[0, 0, 0] : f32 from vector<1x1x1xf32>
      %c0_21 = arith.constant 0 : index
      %c1 = arith.constant 1 : index
      %28 = memref.load %arg3[%c0_21, %c1] : memref<1x2xf32, #tpu.memory_space<smem>>
      memref.store %27, %arg3[%c0_21, %c1] : memref<1x2xf32, #tpu.memory_space<smem>>
    } else {
    }
    return
  }
  func.func @transform_0(%arg0: i32, %arg1: i32) -> (i32, i32) {
    %c1_i32 = arith.constant 1 : i32
    %0 = arith.muli %arg0, %c1_i32 : i32
    %1 = arith.addi %0, %arg1 : i32
    %c0_i32 = arith.constant 0 : i32
    %c0_i32_0 = arith.constant 0 : i32
    return %1, %c0_i32 : i32, i32
  }
  func.func @transform_1(%arg0: i32, %arg1: i32) -> (i32, i32) {
    %c0_i32 = arith.constant 0 : i32
    %c0_i32_0 = arith.constant 0 : i32
    return %arg0, %c0_i32 : i32, i32
  }
}

</mosaic_0001>

<llo_original>
// kernel: tpu_custom_call.1
$region0: #{tpu_custom_call.1}
  #allocation0 [shape = 'u32[]', space=smem, size = 0x4, offset = 0x4, fixed_abs, tag = 'smem constant byte address 0x4 - core index']
  #allocation1 [shape = 'u32[144,128]{1,0:T(1,128)}', space=vmem, size = 0x12000, scoped, tag = 'internal scratch']
  #allocation2 [shape = 'f32[8,256]{1,0:T(8,128)}', space=vmem, size = 0x2000, scoped, tag = 'scratch operand']
  #allocation3 [shape = 'f32[8,256]{1,0:T(8,128)}', space=vmem, size = 0x2000, scoped, tag = 'scratch operand']
  %s0 = inlined_call_operand.hbm [shape: f32[8,256], index: 0, kind: input, shape index: {}]
  %s1 = inlined_call_operand.hbm [shape: f32[1,2], index: 1, kind: output, shape index: {}]
  %s2 = sld [smem:[#allocation0]]
  $region26: #{tpu_custom_call.1} parent=0
    _
  %s4 = ssub.s32 1, %s2
  %s5 = scalar_select 0, %s4, %s2
  $region1: #{tpu_custom_call.1} parent=0
    #allocation4 [shape = 'u8[8192]{0}', space=vmem, size = 0x2000, scoped, tag = 'input window, operand 0, single buffered']
    #allocation5 [shape = 's32[1]{0}', space=sflag, size = 0x4, scoped, tag = 'scoped memory for tpu_custom_call.1']
    #allocation6 [shape = 's32[1]{0}', space=sflag, size = 0x4, scoped, tag = 'scoped memory for tpu_custom_call.1']
    #allocation7 [shape = 'u8[512]{0}', space=smem, size = 0x200, scoped, tag = 'output window, operand 0, single buffered']
    %6 = vsyncpa [#allocation5], 0
    %7 = vsyncpa [#allocation6], 0
    // Predicated region
    $region2: #{tpu_custom_call.1} parent=1 // pred_check
      _
    $region3: #{tpu_custom_call.1} parent=1 // pred_check_branch
      %9 = sbr.rel (0) target = $region5
    $region4: #{tpu_custom_call.1} parent=1 // pred_region
      %s10 = sadd.s32 0, 0
      %s12 = ssub.s32 256, 256
      %13 = vsyncadd [#allocation5], %s12
      %s14 = smul.addr %s10, 2
      %s15 = smul.addr %s14, 128
      %s16 = scalar_lea.hbm %s0, %s15
      %s18 = sshll.u32 [#allocation4], 4
      %s19 = int_to_ptr.vmem [resolvable:$true] %s18
      %21 = dma.hbm_to_vmem [thread:$0]  %s16, 256, %s19, [#allocation5]
    $region5: #{tpu_custom_call.1} parent=1 // pred_fallthru
      _
    // Predicated region
    $region6: #{tpu_custom_call.1} parent=1 // pred_check
      _
    $region7: #{tpu_custom_call.1} parent=1 // pred_check_branch
      %23 = sbr.rel (0) target = $region9
    $region8: #{tpu_custom_call.1} parent=1 // pred_region
      %24 = dma.done [#allocation5], 256
    $region9: #{tpu_custom_call.1} parent=1 // pred_fallthru
      _
    %s25 = sadd.s32 0, 0
    %p26 = scmp.eq.s32.totalorder 0, 0
    // Predicated region
    $region10: #{tpu_custom_call.1} parent=1 // pred_check
      %p27 = pneg %p26
    $region11: #{tpu_custom_call.1} parent=1 // pred_check_branch
      %29 = sbr.rel (%p27) target = $region13
    $region12: #{tpu_custom_call.1} parent=1 // pred_region
      %30 = vst [vmem:[#allocation2] sm:$0xff] 0.0
      %31 = vst [vmem:[#allocation2 + $0x8] sm:$0xff] 0.0
      %32 = vst [vmem:[#allocation3] sm:$0xff] 0.0
      %33 = vst [vmem:[#allocation3 + $0x8] sm:$0xff] 0.0
    $region13: #{tpu_custom_call.1} parent=1 // pred_fallthru
      _
    %v34 = vld [vmem:[#allocation4] sm:$0xff]
    %v35 = vld [vmem:[#allocation4 + $0x8] sm:$0xff]
    %v36 = vld [vmem:[#allocation2] sm:$0xff]
    %v37 = vld [vmem:[#allocation2 + $0x8] sm:$0xff]
    %v38 = vadd.f32 %v34, 0.0
    %v39 = vadd.f32 %v35, 0.0
    %v40 = vadd.f32 %v36, %v38
    %v41 = vadd.f32 %v37, %v39
    %42 = vst [vmem:[#allocation2] sm:$0xff] %v40
    %43 = vst [vmem:[#allocation2 + $0x8] sm:$0xff] %v41
    %v44 = vld [vmem:[#allocation3] sm:$0xff]
    %v45 = vld [vmem:[#allocation3 + $0x8] sm:$0xff]
    %v46 = vmul.f32 %v34, %v34
    %v47 = vmul.f32 %v35, %v35
    %v48 = vadd.f32 %v46, 0.0
    %v49 = vadd.f32 %v47, 0.0
    %v50 = vadd.f32 %v44, %v48
    %v51 = vadd.f32 %v45, %v49
    %52 = vst [vmem:[#allocation3] sm:$0xff] %v50
    %53 = vst [vmem:[#allocation3 + $0x8] sm:$0xff] %v51
    // Predicated region
    $region14: #{tpu_custom_call.1} parent=1 // pred_check
      %p54 = pneg %p26
    $region15: #{tpu_custom_call.1} parent=1 // pred_check_branch
      %56 = sbr.rel (%p54) target = $region17
    $region16: #{tpu_custom_call.1} parent=1 // pred_region
      %v57 = vld [vmem:[#allocation2] sm:$0xff]
      %v58 = vld [vmem:[#allocation2 + $0x8] sm:$0xff]
      %v59 = vadd.f32 %v57, %v58
      %60 = vadd.xlane.f32.xlu0 %v59
      %v61 = vpop.xlane.xlu0 %60
      %v62 = vrot.slane %v61, 4
      %v63 = vadd.f32 %v61, %v62
      %v64 = vrot.slane %v63, 2
      %v65 = vadd.f32 %v63, %v64
      %v66 = vrot.slane %v65, 1
      %v67 = vadd.f32 %v65, %v66
      %s68 = vtos %v67
      %s69 = scalar_lea.smem [#allocation7], 0
      %70 = sst [smem:[%s69]] %s68
      %v71 = vld [vmem:[#allocation3] sm:$0xff]
      %v72 = vld [vmem:[#allocation3 + $0x8] sm:$0xff]
      %v73 = vadd.f32 %v71, %v72
      %74 = vadd.xlane.f32.xlu0 %v73
      %v75 = vpop.xlane.xlu0 %74
      %v76 = vrot.slane %v75, 4
      %v77 = vadd.f32 %v75, %v76
      %v78 = vrot.slane %v77, 2
      %v79 = vadd.f32 %v77, %v78
      %v80 = vrot.slane %v79, 1
      %v81 = vadd.f32 %v79, %v80
      %s82 = vtos %v81
      %s83 = scalar_lea.smem [#allocation7], 1
      %84 = sst [smem:[%s83]] %s82
    $region17: #{tpu_custom_call.1} parent=1 // pred_fallthru
      _
    // Predicated region
    $region18: #{tpu_custom_call.1} parent=1 // pred_check
      _
    $region19: #{tpu_custom_call.1} parent=1 // pred_check_branch
      %86 = sbr.rel (0) target = $region21
    $region20: #{tpu_custom_call.1} parent=1 // pred_region
      %s88 = ssub.s32 16, 16
      %89 = vsyncadd [#allocation6], %s88
      %92 = dma.smem_to_hbm [#allocation7], 16, %s1, [#allocation6]
    $region21: #{tpu_custom_call.1} parent=1 // pred_fallthru
      _
    // Predicated region
    $region22: #{tpu_custom_call.1} parent=1 // pred_check
      _
    $region23: #{tpu_custom_call.1} parent=1 // pred_check_branch
      %94 = sbr.rel (0) target = $region25
    $region24: #{tpu_custom_call.1} parent=1 // pred_region
      %95 = dma.done [#allocation6], 16
    $region25: #{tpu_custom_call.1} parent=1 // pred_fallthru
      _
    %96 = sfence
    %97 = vsyncpa [#allocation5], 1
    %98 = vsyncpa [#allocation6], 1

</llo_original>
